<compile_context>
chip_gen: v6e
topology: v6e:2x2x1
jax: 0.10.0
libtpu: 0.0.40
codegen_flags: <defaults>
</compile_context>

<pallas_src>
import numpy as np
import jax
import jax.numpy as jnp
from jax.experimental import pallas as pl
from jax.experimental.pallas import tpu as pltpu

LANE = 128
CHUNK_ROWS = 256        # in-kernel row chunk: bounds live (rows,128) intermediates


# ----------------------------------------------------------------------------
# Deterministic constant setup (mirrors SPH_CAL.__init__ exactly, in numpy).
# ----------------------------------------------------------------------------
def build_sph_constants(max_l=3):
    L = int(max_l + 1)                      # == self.max_l in the module
    num_lm = (L + 1) * L // 2
    pt = np.zeros((L, L), dtype=np.int64)
    yr = np.zeros((L, L), dtype=np.int64)
    yr_rev = np.zeros((L, L), dtype=np.int64)
    coeff_a = np.zeros((num_lm,), dtype=np.float64)
    coeff_b = np.zeros((num_lm,), dtype=np.float64)
    tmp = np.arange(L, dtype=np.float64)
    with np.errstate(divide="ignore"):
        prefactor1 = -np.sqrt(1.0 + 0.5 / tmp)      # [0] is -inf, never used
    prefactor2 = np.sqrt(2.0 * tmp + 3.0)
    ls = tmp * tmp
    for l in range(L):
        pt[l, 0:l + 1] = np.arange(l + 1) + l * (l + 1) // 2
        yr[l, 0:l + 1] = int(ls[l]) + l + np.arange(l + 1)
        yr_rev[l, 0:l + 1] = int(ls[l]) + l - np.arange(l + 1)
        if l > 0.5:
            coeff_a[pt[l, 0:l]] = np.sqrt((4.0 * ls[l] - 1.0) / (ls[l] - ls[0:l]))
            coeff_b[pt[l, 0:l]] = -np.sqrt((ls[l - 1] - ls[0:l]) / (4.0 * ls[l - 1] - 1.0))
    return dict(
        L=L, pt=pt, yr=yr, yr_rev=yr_rev,
        coeff_a=coeff_a, coeff_b=coeff_b,
        prefactor1=prefactor1, prefactor2=prefactor2,
        sqrt2_rev=float(np.sqrt(0.5)),
        sqrt2pi_rev=float(np.sqrt(0.5 / np.pi)),
        hc_factor1=float(np.sqrt(15.0 / 4.0 / np.pi)),
        hc_factor2=float(np.sqrt(5.0 / 16.0 / np.pi)),
        hc_factor3=float(np.sqrt(15.0 / 16.0 / np.pi)),
    )


# ----------------------------------------------------------------------------
# Shared recursion body.  `emit(idx, f32_value)` is called exactly once per
# harmonic index, in recursion order, so the kernel can stream each harmonic
# straight to out_ref.  Only the l-1 / l-2 levels are kept live (the constant
# harmonic 0 is never read by the recursion and is not kept).
# ----------------------------------------------------------------------------
def _sph_body(x, y, z, d_sq, C, emit):
    L = C["L"]
    pt, yr, yrr = C["pt"], C["yr"], C["yr_rev"]
    ca, cb = C["coeff_a"], C["coeff_b"]
    p1, p2 = C["prefactor1"], C["prefactor2"]
    s2r, s2pir = C["sqrt2_rev"], C["sqrt2pi_rev"]
    hc1, hc2, hc3 = C["hc_factor1"], C["hc_factor2"], C["hc_factor3"]

    vals = {}

    def put(idx, v):
        idx = int(idx)
        if idx > 0:                 # index 0 is never read by the recursion
            vals[idx] = v
        emit(idx, v)

    put(0, jnp.full(x.shape, float(s2pir * s2r), jnp.float32))
    put(1, float(p1[1] * s2pir) * y)
    put(2, float(p2[0] * s2r * s2pir) * z)
    put(3, float(p1[1] * s2pir) * x)
    if L > 2.5:
        put(4, float(hc1) * (x * y))
        put(5, float(-hc1) * (y * z))
        put(6, float(hc2) * (3.0 * z * z - d_sq))
        put(7, float(-hc1) * (x * z))
        put(8, float(hc3) * (x * x - y * y))
        for l in range(3, L):
            for m in range(0, l - 1):
                a = float(ca[pt[l, m]])
                b = float(cb[pt[l, m]])
                put(yr[l, m],
                    a * (z * vals[int(yr[l - 1, m])] + b * d_sq * vals[int(yr[l - 2, m])]))
            for m in range(1, l - 1):
                a = float(ca[pt[l, m]])
                b = float(cb[pt[l, m]])
                put(yrr[l, m],
                    a * (z * vals[int(yrr[l - 1, m])] + b * d_sq * vals[int(yrr[l - 2, m])]))
            put(yr[l, l - 1], float(p2[l - 1]) * z * vals[int(yr[l - 1, l - 1])])
            put(yrr[l, l - 1], float(p2[l - 1]) * z * vals[int(yrr[l - 1, l - 1])])
            put(yr[l, l], float(p1[l]) * (x * vals[int(yr[l - 1, l - 1])]
                                          - y * vals[int(yrr[l - 1, l - 1])]))
            put(yrr[l, l], float(p1[l]) * (x * vals[int(yrr[l - 1, l - 1])]
                                           + y * vals[int(yr[l - 1, l - 1])]))
            # prune level l-2: no longer needed by the recursion
            cutoff = (l - 1) * (l - 1)
            for idx in list(vals.keys()):
                if idx < cutoff:
                    del vals[idx]


# ----------------------------------------------------------------------------
# Pallas kernel: dense (rows, 128) slabs, streaming per-harmonic stores,
# processed in row chunks when the tile is large.
# ----------------------------------------------------------------------------
def make_sph_kernel(C, tm):
    def kernel(cart_ref, out_ref):
        out_dtype = out_ref.dtype

        def do_rows(row0, rows):
            x = cart_ref[0, pl.ds(row0, rows), :].astype(jnp.float32)
            y = cart_ref[1, pl.ds(row0, rows), :].astype(jnp.float32)
            z = cart_ref[2, pl.ds(row0, rows), :].astype(jnp.float32)
            d_sq = x * x + y * y + z * z          # ||cart||^2 along component axis

            def emit(idx, v):
                out_ref[idx, pl.ds(row0, rows), :] = v.astype(out_dtype)

            _sph_body(x, y, z, d_sq, C, emit)

        if tm > CHUNK_ROWS and tm % CHUNK_ROWS == 0:
            @pl.loop(0, tm // CHUNK_ROWS)
            def _(c):
                row0 = pl.multiple_of(c * CHUNK_ROWS, CHUNK_ROWS)
                do_rows(row0, CHUNK_ROWS)
        else:
            do_rows(0, tm)

    return kernel


# ----------------------------------------------------------------------------
# Generation-aware tiling policy.
# ----------------------------------------------------------------------------
def _device_policy():
    kind = ""
    try:
        d = jax.devices()[0]
        if d.platform == "tpu":
            kind = str(getattr(d, "device_kind", "")).lower()
    except Exception:
        pass
    two_tc = "v7" in kind       # v7x: 2 TensorCores/chip share the "parallel" grid axis
    return dict(two_tc=two_tc, tm_cap=512, vmem_limit=48 * 1024 * 1024)


def _round_up(v, m):
    return ((v + m - 1) // m) * m


def sph_cal_pallas(cart, max_l=3, block_rows=None, out_dtype=None):
    """cart: (3, *spatial) -> sph: ((max_l+1)^2, *spatial)."""
    if max_l < 1:
        raise ValueError(
            "The angular momentum must be greater than or equal to 1. Or the angular "
            "momentum is lack of angular information, the calculation of the sph is meanless.")
    C = build_sph_constants(max_l)
    L = C["L"]
    L2 = L * L
    assert cart.shape[0] == 3
    rest = cart.shape[1:]
    N = int(np.prod(rest)) if rest else 1
    in_dtype = cart.dtype
    out_dtype = in_dtype if out_dtype is None else jnp.dtype(out_dtype)

    # Minimal lane padding only: ceil(N/128) rows of 128 points.
    Rp = max(1, -(-N // LANE))
    Np = Rp * LANE

    pol = _device_policy()
    tm_cap = pol["tm_cap"]

    if block_rows is not None:
        tm = int(block_rows)
        tm = Rp if tm >= Rp else max(8, (tm // 8) * 8)
    elif Rp <= 8:
        tm = Rp                                   # single full-extent block
    elif not pol["two_tc"]:
        # single-TC (v5e/v6e): biggest tile that fits; >=2 steps only for large inputs
        tm = Rp if Rp <= tm_cap else tm_cap
    else:
        # v7x: at least 2 grid steps, even step count so both TCs get equal work.
        tm = min(tm_cap, _round_up(-(-Rp // 2), 8))
        steps = -(-Rp // tm)
        if steps > 1 and steps % 2 == 1:
            tm = max(8, _round_up(-(-Rp // (steps + 1)), 8))

    grid = (pl.cdiv(Rp, tm),)                     # partial last block is masked by Pallas

    cart_flat = cart.reshape(3, N)
    if Np != N:
        cart_flat = jnp.pad(cart_flat, ((0, 0), (0, Np - N)))
    cart3 = cart_flat.reshape(3, Rp, LANE)

    cost = pl.CostEstimate(
        flops=int(Np * 6 * L2),
        transcendentals=0,
        bytes_accessed=int(Np * (3 * np.dtype(in_dtype).itemsize
                                 + L2 * np.dtype(out_dtype).itemsize)))

    out = pl.pallas_call(
        make_sph_kernel(C, tm),
        out_shape=jax.ShapeDtypeStruct((L2, Rp, LANE), out_dtype),
        grid=grid,
        in_specs=[pl.BlockSpec((3, tm, LANE), lambda i: (0, i, 0))],
        out_specs=pl.BlockSpec((L2, tm, LANE), lambda i: (0, i, 0)),
        compiler_params=pltpu.CompilerParams(
            dimension_semantics=("parallel",),
            vmem_limit_bytes=pol["vmem_limit"]),
        cost_estimate=cost,
    )(cart3)

    out = out.reshape(L2, Np)
    if Np != N:
        # TODO(synk): for ragged N a consumer that accepts the padded (L2, Rp*128)
        # slab would avoid this de-pad copy entirely.
        out = out[:, :N]
    return out.reshape((L2,) + rest)


# ----------------------------------------------------------------------------
# Pure-JAX reference (same math, no Pallas) for a correctness check.
# ----------------------------------------------------------------------------
def sph_cal_ref(cart, max_l=3):
    C = build_sph_constants(max_l)
    L = C["L"]
    L2 = L * L
    rest = cart.shape[1:]
    N = int(np.prod(rest)) if rest else 1
    cf = cart.reshape(3, N).astype(jnp.float32)
    x, y, z = cf[0], cf[1], cf[2]
    d_sq = x * x + y * y + z * z

    rows = [None] * L2

    def emit(idx, v):
        rows[idx] = v

    _sph_body(x, y, z, d_sq, C, emit)
    out = jnp.stack(rows, axis=0).astype(cart.dtype)
    return out.reshape((L2,) + rest)


if __name__ == "__main__":
    key = jax.random.PRNGKey(0)

    # 1) N multiple of 128: no pad / no de-pad, single full-extent block.
    cart = jax.random.normal(key, (3, 4, 128), dtype=jnp.float32)
    sph = jax.block_until_ready(sph_cal_pallas(cart, max_l=3))
    ref = sph_cal_ref(cart, max_l=3)
    np.testing.assert_allclose(np.asarray(sph), np.asarray(ref), rtol=1e-5, atol=1e-5)
    assert sph.shape == (16, 4, 128)

    # 2) ragged point count + explicit small tile -> multi-step grid with a
    #    partial (masked) final block; lane padding sliced off at the end.
    cart2 = jax.random.normal(jax.random.PRNGKey(1), (3, 2600), dtype=jnp.float32)
    sph2 = jax.block_until_ready(sph_cal_pallas(cart2, max_l=3, block_rows=8))
    ref2 = sph_cal_ref(cart2, max_l=3)
    np.testing.assert_allclose(np.asarray(sph2), np.asarray(ref2), rtol=1e-5, atol=1e-5)
    assert sph2.shape == (16, 2600)

    # 3) auto tile policy (big tile / even v7x split) + in-kernel row chunking
    #    + partial last block, no lane padding.
    cart3 = jax.random.normal(jax.random.PRNGKey(2), (3, 520, 128), dtype=jnp.float32)
    sph3 = jax.block_until_ready(sph_cal_pallas(cart3, max_l=3))
    ref3 = sph_cal_ref(cart3, max_l=3)
    np.testing.assert_allclose(np.asarray(sph3), np.asarray(ref3), rtol=1e-5, atol=1e-5)
    assert sph3.shape == (16, 520, 128)

    print("KERNEL_OK")
</pallas_src>

<mosaic_0001>
module attributes {stable_mosaic.version = 11 : i64} {
  func.func @kernel(%arg0: i32, %arg1: memref<3x4x128xf32, #tpu.memory_space<vmem>>, %arg2: memref<16x4x128xf32, #tpu.memory_space<vmem>>) attributes {dimension_semantics = [#tpu.dimension_semantics<parallel>], iteration_bounds = array<i64: 1>, scalar_prefetch = 0 : i64, scratch_operands = 0 : i64, tpu.core_type = #tpu.core_type<tc>, window_params = [{transform_indices = @transform_0, window_bounds = array<i64: 3, 4, 128>}, {transform_indices = @transform_1, window_bounds = array<i64: 16, 4, 128>}]} {
    %c0 = arith.constant 0 : index
    %c0_0 = arith.constant 0 : index
    %c0_1 = arith.constant 0 : index
    %0 = vector.load %arg1[%c0, %c0_0, %c0_1] : memref<3x4x128xf32, #tpu.memory_space<vmem>>, vector<1x4x128xf32>
    %1 = vector.shape_cast %0 : vector<1x4x128xf32> to vector<4x128xf32>
    %c1 = arith.constant 1 : index
    %c0_2 = arith.constant 0 : index
    %c0_3 = arith.constant 0 : index
    %2 = vector.load %arg1[%c1, %c0_2, %c0_3] : memref<3x4x128xf32, #tpu.memory_space<vmem>>, vector<1x4x128xf32>
    %3 = vector.shape_cast %2 : vector<1x4x128xf32> to vector<4x128xf32>
    %c2 = arith.constant 2 : index
    %c0_4 = arith.constant 0 : index
    %c0_5 = arith.constant 0 : index
    %4 = vector.load %arg1[%c2, %c0_4, %c0_5] : memref<3x4x128xf32, #tpu.memory_space<vmem>>, vector<1x4x128xf32>
    %5 = vector.shape_cast %4 : vector<1x4x128xf32> to vector<4x128xf32>
    %6 = arith.mulf %1, %1 : vector<4x128xf32>
    %7 = arith.mulf %3, %3 : vector<4x128xf32>
    %8 = arith.addf %6, %7 : vector<4x128xf32>
    %9 = arith.mulf %5, %5 : vector<4x128xf32>
    %10 = arith.addf %8, %9 : vector<4x128xf32>
    %cst = arith.constant 0.282094806 : f32
    %11 = vector.broadcast %cst : f32 to vector<4x128xf32>
    %c0_6 = arith.constant 0 : index
    %c0_7 = arith.constant 0 : index
    %c0_8 = arith.constant 0 : index
    %12 = vector.load %arg2[%c0_6, %c0_7, %c0_8] : memref<16x4x128xf32, #tpu.memory_space<vmem>>, vector<1x4x128xf32>
    %13 = vector.shape_cast %12 : vector<1x4x128xf32> to vector<4x128xf32>
    %14 = vector.shape_cast %11 : vector<4x128xf32> to vector<1x4x128xf32>
    tpu.vector_store %arg2[%c0_6, %c0_7, %c0_8], %14 {strides = array<i32>} : memref<16x4x128xf32, #tpu.memory_space<vmem>>, vector<1x4x128xf32>,
    %cst_9 = arith.constant -0.488602519 : f32
    %15 = vector.broadcast %cst_9 : f32 to vector<4x128xf32>
    %16 = arith.mulf %15, %3 : vector<4x128xf32>
    %c1_10 = arith.constant 1 : index
    %c0_11 = arith.constant 0 : index
    %c0_12 = arith.constant 0 : index
    %17 = vector.load %arg2[%c1_10, %c0_11, %c0_12] : memref<16x4x128xf32, #tpu.memory_space<vmem>>, vector<1x4x128xf32>
    %18 = vector.shape_cast %17 : vector<1x4x128xf32> to vector<4x128xf32>
    %19 = vector.shape_cast %16 : vector<4x128xf32> to vector<1x4x128xf32>
    tpu.vector_store %arg2[%c1_10, %c0_11, %c0_12], %19 {strides = array<i32>} : memref<16x4x128xf32, #tpu.memory_space<vmem>>, vector<1x4x128xf32>,
    %cst_13 = arith.constant 0.488602519 : f32
    %20 = vector.broadcast %cst_13 : f32 to vector<4x128xf32>
    %21 = arith.mulf %20, %5 : vector<4x128xf32>
    %c2_14 = arith.constant 2 : index
    %c0_15 = arith.constant 0 : index
    %c0_16 = arith.constant 0 : index
    %22 = vector.load %arg2[%c2_14, %c0_15, %c0_16] : memref<16x4x128xf32, #tpu.memory_space<vmem>>, vector<1x4x128xf32>
    %23 = vector.shape_cast %22 : vector<1x4x128xf32> to vector<4x128xf32>
    %24 = vector.shape_cast %21 : vector<4x128xf32> to vector<1x4x128xf32>
    tpu.vector_store %arg2[%c2_14, %c0_15, %c0_16], %24 {strides = array<i32>} : memref<16x4x128xf32, #tpu.memory_space<vmem>>, vector<1x4x128xf32>,
    %cst_17 = arith.constant -0.488602519 : f32
    %25 = vector.broadcast %cst_17 : f32 to vector<4x128xf32>
    %26 = arith.mulf %25, %1 : vector<4x128xf32>
    %c3 = arith.constant 3 : index
    %c0_18 = arith.constant 0 : index
    %c0_19 = arith.constant 0 : index
    %27 = vector.load %arg2[%c3, %c0_18, %c0_19] : memref<16x4x128xf32, #tpu.memory_space<vmem>>, vector<1x4x128xf32>
    %28 = vector.shape_cast %27 : vector<1x4x128xf32> to vector<4x128xf32>
    %29 = vector.shape_cast %26 : vector<4x128xf32> to vector<1x4x128xf32>
    tpu.vector_store %arg2[%c3, %c0_18, %c0_19], %29 {strides = array<i32>} : memref<16x4x128xf32, #tpu.memory_space<vmem>>, vector<1x4x128xf32>,
    %30 = arith.mulf %1, %3 : vector<4x128xf32>
    %cst_20 = arith.constant 1.09254849 : f32
    %31 = vector.broadcast %cst_20 : f32 to vector<4x128xf32>
    %32 = arith.mulf %31, %30 : vector<4x128xf32>
    %c4 = arith.constant 4 : index
    %c0_21 = arith.constant 0 : index
    %c0_22 = arith.constant 0 : index
    %33 = vector.load %arg2[%c4, %c0_21, %c0_22] : memref<16x4x128xf32, #tpu.memory_space<vmem>>, vector<1x4x128xf32>
    %34 = vector.shape_cast %33 : vector<1x4x128xf32> to vector<4x128xf32>
    %35 = vector.shape_cast %32 : vector<4x128xf32> to vector<1x4x128xf32>
    tpu.vector_store %arg2[%c4, %c0_21, %c0_22], %35 {strides = array<i32>} : memref<16x4x128xf32, #tpu.memory_space<vmem>>, vector<1x4x128xf32>,
    %36 = arith.mulf %3, %5 : vector<4x128xf32>
    %cst_23 = arith.constant -1.09254849 : f32
    %37 = vector.broadcast %cst_23 : f32 to vector<4x128xf32>
    %38 = arith.mulf %37, %36 : vector<4x128xf32>
    %c5 = arith.constant 5 : index
    %c0_24 = arith.constant 0 : index
    %c0_25 = arith.constant 0 : index
    %39 = vector.load %arg2[%c5, %c0_24, %c0_25] : memref<16x4x128xf32, #tpu.memory_space<vmem>>, vector<1x4x128xf32>
    %40 = vector.shape_cast %39 : vector<1x4x128xf32> to vector<4x128xf32>
    %41 = vector.shape_cast %38 : vector<4x128xf32> to vector<1x4x128xf32>
    tpu.vector_store %arg2[%c5, %c0_24, %c0_25], %41 {strides = array<i32>} : memref<16x4x128xf32, #tpu.memory_space<vmem>>, vector<1x4x128xf32>,
    %cst_26 = arith.constant 3.000000e+00 : f32
    %42 = vector.broadcast %cst_26 : f32 to vector<4x128xf32>
    %43 = arith.mulf %42, %5 : vector<4x128xf32>
    %44 = arith.mulf %43, %5 : vector<4x128xf32>
    %45 = arith.subf %44, %10 : vector<4x128xf32>
    %cst_27 = arith.constant 0.31539157 : f32
    %46 = vector.broadcast %cst_27 : f32 to vector<4x128xf32>
    %47 = arith.mulf %46, %45 : vector<4x128xf32>
    %c6 = arith.constant 6 : index
    %c0_28 = arith.constant 0 : index
    %c0_29 = arith.constant 0 : index
    %48 = vector.load %arg2[%c6, %c0_28, %c0_29] : memref<16x4x128xf32, #tpu.memory_space<vmem>>, vector<1x4x128xf32>
    %49 = vector.shape_cast %48 : vector<1x4x128xf32> to vector<4x128xf32>
    %50 = vector.shape_cast %47 : vector<4x128xf32> to vector<1x4x128xf32>
    tpu.vector_store %arg2[%c6, %c0_28, %c0_29], %50 {strides = array<i32>} : memref<16x4x128xf32, #tpu.memory_space<vmem>>, vector<1x4x128xf32>,
    %51 = arith.mulf %1, %5 : vector<4x128xf32>
    %cst_30 = arith.constant -1.09254849 : f32
    %52 = vector.broadcast %cst_30 : f32 to vector<4x128xf32>
    %53 = arith.mulf %52, %51 : vector<4x128xf32>
    %c7 = arith.constant 7 : index
    %c0_31 = arith.constant 0 : index
    %c0_32 = arith.constant 0 : index
    %54 = vector.load %arg2[%c7, %c0_31, %c0_32] : memref<16x4x128xf32, #tpu.memory_space<vmem>>, vector<1x4x128xf32>
    %55 = vector.shape_cast %54 : vector<1x4x128xf32> to vector<4x128xf32>
    %56 = vector.shape_cast %53 : vector<4x128xf32> to vector<1x4x128xf32>
    tpu.vector_store %arg2[%c7, %c0_31, %c0_32], %56 {strides = array<i32>} : memref<16x4x128xf32, #tpu.memory_space<vmem>>, vector<1x4x128xf32>,
    %57 = arith.mulf %1, %1 : vector<4x128xf32>
    %58 = arith.mulf %3, %3 : vector<4x128xf32>
    %59 = arith.subf %57, %58 : vector<4x128xf32>
    %cst_33 = arith.constant 0.546274245 : f32
    %60 = vector.broadcast %cst_33 : f32 to vector<4x128xf32>
    %61 = arith.mulf %60, %59 : vector<4x128xf32>
    %c8 = arith.constant 8 : index
    %c0_34 = arith.constant 0 : index
    %c0_35 = arith.constant 0 : index
    %62 = vector.load %arg2[%c8, %c0_34, %c0_35] : memref<16x4x128xf32, #tpu.memory_space<vmem>>, vector<1x4x128xf32>
    %63 = vector.shape_cast %62 : vector<1x4x128xf32> to vector<4x128xf32>
    %64 = vector.shape_cast %61 : vector<4x128xf32> to vector<1x4x128xf32>
    tpu.vector_store %arg2[%c8, %c0_34, %c0_35], %64 {strides = array<i32>} : memref<16x4x128xf32, #tpu.memory_space<vmem>>, vector<1x4x128xf32>,
    %65 = arith.mulf %5, %47 : vector<4x128xf32>
    %cst_36 = arith.constant -0.516397774 : f32
    %66 = vector.broadcast %cst_36 : f32 to vector<4x128xf32>
    %67 = arith.mulf %66, %10 : vector<4x128xf32>
    %68 = arith.mulf %67, %21 : vector<4x128xf32>
    %69 = arith.addf %65, %68 : vector<4x128xf32>
    %cst_37 = arith.constant 1.97202659 : f32
    %70 = vector.broadcast %cst_37 : f32 to vector<4x128xf32>
    %71 = arith.mulf %70, %69 : vector<4x128xf32>
    %c12 = arith.constant 12 : index
    %c0_38 = arith.constant 0 : index
    %c0_39 = arith.constant 0 : index
    %72 = vector.load %arg2[%c12, %c0_38, %c0_39] : memref<16x4x128xf32, #tpu.memory_space<vmem>>, vector<1x4x128xf32>
    %73 = vector.shape_cast %72 : vector<1x4x128xf32> to vector<4x128xf32>
    %74 = vector.shape_cast %71 : vector<4x128xf32> to vector<1x4x128xf32>
    tpu.vector_store %arg2[%c12, %c0_38, %c0_39], %74 {strides = array<i32>} : memref<16x4x128xf32, #tpu.memory_space<vmem>>, vector<1x4x128xf32>,
    %75 = arith.mulf %5, %53 : vector<4x128xf32>
    %cst_40 = arith.constant -0.44721359 : f32
    %76 = vector.broadcast %cst_40 : f32 to vector<4x128xf32>
    %77 = arith.mulf %76, %10 : vector<4x128xf32>
    %78 = arith.mulf %77, %26 : vector<4x128xf32>
    %79 = arith.addf %75, %78 : vector<4x128xf32>
    %cst_41 = arith.constant 2.091650e+00 : f32
    %80 = vector.broadcast %cst_41 : f32 to vector<4x128xf32>
    %81 = arith.mulf %80, %79 : vector<4x128xf32>
    %c13 = arith.constant 13 : index
    %c0_42 = arith.constant 0 : index
    %c0_43 = arith.constant 0 : index
    %82 = vector.load %arg2[%c13, %c0_42, %c0_43] : memref<16x4x128xf32, #tpu.memory_space<vmem>>, vector<1x4x128xf32>
    %83 = vector.shape_cast %82 : vector<1x4x128xf32> to vector<4x128xf32>
    %84 = vector.shape_cast %81 : vector<4x128xf32> to vector<1x4x128xf32>
    tpu.vector_store %arg2[%c13, %c0_42, %c0_43], %84 {strides = array<i32>} : memref<16x4x128xf32, #tpu.memory_space<vmem>>, vector<1x4x128xf32>,
    %85 = arith.mulf %5, %38 : vector<4x128xf32>
    %cst_44 = arith.constant -0.44721359 : f32
    %86 = vector.broadcast %cst_44 : f32 to vector<4x128xf32>
    %87 = arith.mulf %86, %10 : vector<4x128xf32>
    %88 = arith.mulf %87, %16 : vector<4x128xf32>
    %89 = arith.addf %85, %88 : vector<4x128xf32>
    %cst_45 = arith.constant 2.091650e+00 : f32
    %90 = vector.broadcast %cst_45 : f32 to vector<4x128xf32>
    %91 = arith.mulf %90, %89 : vector<4x128xf32>
    %c11 = arith.constant 11 : index
    %c0_46 = arith.constant 0 : index
    %c0_47 = arith.constant 0 : index
    %92 = vector.load %arg2[%c11, %c0_46, %c0_47] : memref<16x4x128xf32, #tpu.memory_space<vmem>>, vector<1x4x128xf32>
    %93 = vector.shape_cast %92 : vector<1x4x128xf32> to vector<4x128xf32>
    %94 = vector.shape_cast %91 : vector<4x128xf32> to vector<1x4x128xf32>
    tpu.vector_store %arg2[%c11, %c0_46, %c0_47], %94 {strides = array<i32>} : memref<16x4x128xf32, #tpu.memory_space<vmem>>, vector<1x4x128xf32>,
    %cst_48 = arith.constant 2.64575124 : f32
    %95 = vector.broadcast %cst_48 : f32 to vector<4x128xf32>
    %96 = arith.mulf %95, %5 : vector<4x128xf32>
    %97 = arith.mulf %96, %61 : vector<4x128xf32>
    %c14 = arith.constant 14 : index
    %c0_49 = arith.constant 0 : index
    %c0_50 = arith.constant 0 : index
    %98 = vector.load %arg2[%c14, %c0_49, %c0_50] : memref<16x4x128xf32, #tpu.memory_space<vmem>>, vector<1x4x128xf32>
    %99 = vector.shape_cast %98 : vector<1x4x128xf32> to vector<4x128xf32>
    %100 = vector.shape_cast %97 : vector<4x128xf32> to vector<1x4x128xf32>
    tpu.vector_store %arg2[%c14, %c0_49, %c0_50], %100 {strides = array<i32>} : memref<16x4x128xf32, #tpu.memory_space<vmem>>, vector<1x4x128xf32>,
    %cst_51 = arith.constant 2.64575124 : f32
    %101 = vector.broadcast %cst_51 : f32 to vector<4x128xf32>
    %102 = arith.mulf %101, %5 : vector<4x128xf32>
    %103 = arith.mulf %102, %32 : vector<4x128xf32>
    %c10 = arith.constant 10 : index
    %c0_52 = arith.constant 0 : index
    %c0_53 = arith.constant 0 : index
    %104 = vector.load %arg2[%c10, %c0_52, %c0_53] : memref<16x4x128xf32, #tpu.memory_space<vmem>>, vector<1x4x128xf32>
    %105 = vector.shape_cast %104 : vector<1x4x128xf32> to vector<4x128xf32>
    %106 = vector.shape_cast %103 : vector<4x128xf32> to vector<1x4x128xf32>
    tpu.vector_store %arg2[%c10, %c0_52, %c0_53], %106 {strides = array<i32>} : memref<16x4x128xf32, #tpu.memory_space<vmem>>, vector<1x4x128xf32>,
    %107 = arith.mulf %1, %61 : vector<4x128xf32>
    %108 = arith.mulf %3, %32 : vector<4x128xf32>
    %109 = arith.subf %107, %108 : vector<4x128xf32>
    %cst_54 = arith.constant -1.08012342 : f32
    %110 = vector.broadcast %cst_54 : f32 to vector<4x128xf32>
    %111 = arith.mulf %110, %109 : vector<4x128xf32>
    %c15 = arith.constant 15 : index
    %c0_55 = arith.constant 0 : index
    %c0_56 = arith.constant 0 : index
    %112 = vector.load %arg2[%c15, %c0_55, %c0_56] : memref<16x4x128xf32, #tpu.memory_space<vmem>>, vector<1x4x128xf32>
    %113 = vector.shape_cast %112 : vector<1x4x128xf32> to vector<4x128xf32>
    %114 = vector.shape_cast %111 : vector<4x128xf32> to vector<1x4x128xf32>
    tpu.vector_store %arg2[%c15, %c0_55, %c0_56], %114 {strides = array<i32>} : memref<16x4x128xf32, #tpu.memory_space<vmem>>, vector<1x4x128xf32>,
    %115 = arith.mulf %1, %32 : vector<4x128xf32>
    %116 = arith.mulf %3, %61 : vector<4x128xf32>
    %117 = arith.addf %115, %116 : vector<4x128xf32>
    %cst_57 = arith.constant -1.08012342 : f32
    %118 = vector.broadcast %cst_57 : f32 to vector<4x128xf32>
    %119 = arith.mulf %118, %117 : vector<4x128xf32>
    %c9 = arith.constant 9 : index
    %c0_58 = arith.constant 0 : index
    %c0_59 = arith.constant 0 : index
    %120 = vector.load %arg2[%c9, %c0_58, %c0_59] : memref<16x4x128xf32, #tpu.memory_space<vmem>>, vector<1x4x128xf32>
    %121 = vector.shape_cast %120 : vector<1x4x128xf32> to vector<4x128xf32>
    %122 = vector.shape_cast %119 : vector<4x128xf32> to vector<1x4x128xf32>
    tpu.vector_store %arg2[%c9, %c0_58, %c0_59], %122 {strides = array<i32>} : memref<16x4x128xf32, #tpu.memory_space<vmem>>, vector<1x4x128xf32>,
    return
  }
  func.func @transform_0(%arg0: i32) -> (i32, i32, i32) {
    %c0_i32 = arith.constant 0 : i32
    %c0_i32_0 = arith.constant 0 : i32
    %c0_i32_1 = arith.constant 0 : i32
    return %c0_i32, %arg0, %c0_i32_0 : i32, i32, i32
  }
  func.func @transform_1(%arg0: i32) -> (i32, i32, i32) {
    %c0_i32 = arith.constant 0 : i32
    %c0_i32_0 = arith.constant 0 : i32
    %c0_i32_1 = arith.constant 0 : i32
    return %c0_i32, %arg0, %c0_i32_0 : i32, i32, i32
  }
}

</mosaic_0001>

<llo_original>
// kernel: tpu_custom_call.1
$region0: #{tpu_custom_call.1}
  #allocation0 [shape = 'u32[]', space=smem, size = 0x4, offset = 0x4, fixed_abs, tag = 'smem constant byte address 0x4 - core index']
  #allocation1 [shape = 'u32[144,128]{1,0:T(1,128)}', space=vmem, size = 0x12000, scoped, tag = 'internal scratch']
  %s0 = inlined_call_operand.hbm [shape: f32[3,4,128], index: 0, kind: input, shape index: {}]
  %s1 = inlined_call_operand.hbm [shape: f32[16,4,128], index: 1, kind: output, shape index: {}]
  %s2 = sld [smem:[#allocation0]]
  $region18: #{tpu_custom_call.1} parent=0
    _
  %s4 = ssub.s32 1, %s2
  %s5 = scalar_select 0, %s4, %s2
  $region1: #{tpu_custom_call.1} parent=0
    #allocation2 [shape = 'u8[6144]{0}', space=vmem, size = 0x1800, scoped, tag = 'input window, operand 0, single buffered']
    #allocation3 [shape = 's32[1]{0}', space=sflag, size = 0x4, scoped, tag = 'scoped memory for tpu_custom_call.1']
    #allocation4 [shape = 's32[1]{0}', space=sflag, size = 0x4, scoped, tag = 'scoped memory for tpu_custom_call.1']
    #allocation5 [shape = 'u8[32768]{0}', space=vmem, size = 0x8000, scoped, tag = 'output window, operand 0, single buffered']
    %6 = vsyncpa [#allocation3], 0
    %7 = vsyncpa [#allocation4], 0
    // Predicated region
    $region2: #{tpu_custom_call.1} parent=1 // pred_check
      _
    $region3: #{tpu_custom_call.1} parent=1 // pred_check_branch
      %9 = sbr.rel (0) target = $region5
    $region4: #{tpu_custom_call.1} parent=1 // pred_region
      %s11 = ssub.s32 192, 192
      %12 = vsyncadd [#allocation3], %s11
      %s13 = sshll.u32 [#allocation2], 4
      %s14 = int_to_ptr.vmem [resolvable:$true] %s13
      %19 = dma.hbm_to_vmem [thread:$0]  %s0, 192, %s14, [#allocation3], 64, 64, 4
    $region5: #{tpu_custom_call.1} parent=1 // pred_fallthru
      _
    // Predicated region
    $region6: #{tpu_custom_call.1} parent=1 // pred_check
      _
    $region7: #{tpu_custom_call.1} parent=1 // pred_check_branch
      %21 = sbr.rel (0) target = $region9
    $region8: #{tpu_custom_call.1} parent=1 // pred_region
      %22 = dma.done [#allocation3], 192
    $region9: #{tpu_custom_call.1} parent=1 // pred_fallthru
      _
    %v23 = vld [vmem:[#allocation2] sm:$0xf]
    %s24 = scalar_lea.vmem [#allocation2], 4
    %v25 = vld [vmem:[%s24] sm:$0xf]
    %s26 = scalar_lea.vmem [#allocation2], 8
    %v27 = vld [vmem:[%s26] sm:$0xf]
    %v28 = vmul.f32 %v23, %v23
    %v29 = vmul.f32 %v25, %v25
    %v30 = vadd.f32 %v28, %v29
    %v31 = vmul.f32 %v27, %v27
    %v32 = vadd.f32 %v30, %v31
    %33 = vst [vmem:[#allocation5] sm:$0xf] 0.2820948
    %v34 = vmul.f32 %v25, -0.48860252
    %s35 = scalar_lea.vmem [#allocation5], 4
    %36 = vst [vmem:[%s35] sm:$0xf] %v34
    %v37 = vmul.f32 %v27, 0.48860252
    %s38 = scalar_lea.vmem [#allocation5], 8
    %39 = vst [vmem:[%s38] sm:$0xf] %v37
    %v40 = vmul.f32 %v23, -0.48860252
    %s41 = scalar_lea.vmem [#allocation5], 12
    %42 = vst [vmem:[%s41] sm:$0xf] %v40
    %v43 = vmul.f32 %v23, %v25
    %v44 = vmul.f32 %v43, 1.0925485
    %s45 = scalar_lea.vmem [#allocation5], 16
    %46 = vst [vmem:[%s45] sm:$0xf] %v44
    %v47 = vmul.f32 %v25, %v27
    %v48 = vmul.f32 %v47, -1.0925485
    %s49 = scalar_lea.vmem [#allocation5], 20
    %50 = vst [vmem:[%s49] sm:$0xf] %v48
    %v51 = vmul.f32 %v27, 3.0
    %v52 = vmul.f32 %v51, %v27
    %v53 = vsub.f32 %v52, %v32
    %v54 = vmul.f32 %v53, 0.31539157
    %s55 = scalar_lea.vmem [#allocation5], 24
    %56 = vst [vmem:[%s55] sm:$0xf] %v54
    %v57 = vmul.f32 %v23, %v27
    %v58 = vmul.f32 %v57, -1.0925485
    %s59 = scalar_lea.vmem [#allocation5], 28
    %60 = vst [vmem:[%s59] sm:$0xf] %v58
    %v61 = vsub.f32 %v28, %v29
    %v62 = vmul.f32 %v61, 0.54627424
    %s63 = scalar_lea.vmem [#allocation5], 32
    %64 = vst [vmem:[%s63] sm:$0xf] %v62
    %v65 = vmul.f32 %v27, %v54
    %v66 = vmul.f32 %v32, -0.5163978
    %v67 = vmul.f32 %v66, %v37
    %v68 = vadd.f32 %v65, %v67
    %v69 = vmul.f32 %v68, 1.9720266
    %s70 = scalar_lea.vmem [#allocation5], 48
    %71 = vst [vmem:[%s70] sm:$0xf] %v69
    %v72 = vmul.f32 %v27, %v58
    %v73 = vmul.f32 %v32, -0.4472136
    %v74 = vmul.f32 %v73, %v40
    %v75 = vadd.f32 %v72, %v74
    %v76 = vmul.f32 %v75, 2.09165
    %s77 = scalar_lea.vmem [#allocation5], 52
    %78 = vst [vmem:[%s77] sm:$0xf] %v76
    %v79 = vmul.f32 %v27, %v48
    %v80 = vmul.f32 %v73, %v34
    %v81 = vadd.f32 %v79, %v80
    %v82 = vmul.f32 %v81, 2.09165
    %s83 = scalar_lea.vmem [#allocation5], 44
    %84 = vst [vmem:[%s83] sm:$0xf] %v82
    %v85 = vmul.f32 %v27, 2.6457512
    %v86 = vmul.f32 %v85, %v62
    %s87 = scalar_lea.vmem [#allocation5], 56
    %88 = vst [vmem:[%s87] sm:$0xf] %v86
    %v89 = vmul.f32 %v85, %v44
    %s90 = scalar_lea.vmem [#allocation5], 40
    %91 = vst [vmem:[%s90] sm:$0xf] %v89
    %v92 = vmul.f32 %v23, %v62
    %v93 = vmul.f32 %v25, %v44
    %v94 = vsub.f32 %v92, %v93
    %v95 = vmul.f32 %v94, -1.0801234
    %s96 = scalar_lea.vmem [#allocation5], 60
    %97 = vst [vmem:[%s96] sm:$0xf] %v95
    %v98 = vmul.f32 %v23, %v44
    %v99 = vmul.f32 %v25, %v62
    %v100 = vadd.f32 %v98, %v99
    %v101 = vmul.f32 %v100, -1.0801234
    %s102 = scalar_lea.vmem [#allocation5], 36
    %103 = vst [vmem:[%s102] sm:$0xf] %v101
    // Predicated region
    $region10: #{tpu_custom_call.1} parent=1 // pred_check
      _
    $region11: #{tpu_custom_call.1} parent=1 // pred_check_branch
      %105 = sbr.rel (0) target = $region13
    $region12: #{tpu_custom_call.1} parent=1 // pred_region
      %s107 = ssub.s32 1024, 1024
      %108 = vsyncadd [#allocation4], %s107
      %s109 = sshll.u32 [#allocation5], 4
      %s110 = int_to_ptr.vmem [resolvable:$true] %s109
      %115 = dma.vmem_to_hbm [thread:$0]  %s110, 1024, %s1, [#allocation4], 64, 64, 4
    $region13: #{tpu_custom_call.1} parent=1 // pred_fallthru
      _
    // Predicated region
    $region14: #{tpu_custom_call.1} parent=1 // pred_check
      _
    $region15: #{tpu_custom_call.1} parent=1 // pred_check_branch
      %117 = sbr.rel (0) target = $region17
    $region16: #{tpu_custom_call.1} parent=1 // pred_region
      %118 = dma.done [#allocation4], 1024
    $region17: #{tpu_custom_call.1} parent=1 // pred_fallthru
      _
    %119 = vsyncpa [#allocation3], 1
    %120 = vsyncpa [#allocation4], 1

</llo_original>
